<compile_context>
chip_gen: v7x
topology: tpu7x:2x2x1
jax: 0.10.0
libtpu: 0.0.40
codegen_flags: <defaults>
</compile_context>

<pallas_src>
import math

import jax
import jax.numpy as jnp
import numpy as np
from jax import lax
from jax.experimental import pallas as pl
from jax.experimental.pallas import tpu as pltpu

_LANES = 128


def _cdiv(a, b):
    return -(-a // b)


def _round_up(a, b):
    return _cdiv(a, b) * b


def _make_hist_kernel(l_pad: int, tile_rows: int, sub_rows: int):
    """Per-tile label histogram.

    masks_ref : (tile_rows, 128) integer labels (one grid step's pixel slab).
    acc_ref   : (l_pad, 128) f32 resident accumulator; acc[l, w] counts pixels
                with label l seen so far in lane column w.
    out_ref   : (8, l_pad) f32, written on the last reduction step only
                (labels lane-dense).
    """
    n_full, rem = divmod(tile_rows, sub_rows)

    def kernel(masks_ref, out_ref, acc_ref):
        p = pl.program_id(2)

        @pl.when(p == 0)
        def _init():
            acc_ref[...] = jnp.zeros_like(acc_ref)

        # labels[l, :] == l  (label index lives on the sublane axis).
        labels = lax.broadcasted_iota(jnp.int32, (l_pad, _LANES), 0)

        def block_hist(blk):
            # blk: (s, 128) labels -> (l_pad, 128) f32 partial counts.
            # Row-wise accumulation keeps the live set at ~2*l_pad/8 vregs
            # instead of materialising an (s, l_pad, 128) one-hot tensor.
            s = blk.shape[0]
            part = (blk[0:1, :] == labels).astype(jnp.float32)
            for r in range(1, s):
                part = part + (blk[r:r + 1, :] == labels).astype(jnp.float32)
            return part

        if n_full > 0:
            @pl.loop(0, n_full)
            def _(i):
                start = pl.multiple_of(i * sub_rows, sub_rows)
                blk = masks_ref[pl.ds(start, sub_rows), :].astype(jnp.int32)
                acc_ref[...] += block_hist(blk)

        if rem:
            blk = masks_ref[pl.ds(n_full * sub_rows, rem), :].astype(jnp.int32)
            acc_ref[...] += block_hist(blk)

        @pl.when(p == pl.num_programs(2) - 1)
        def _finalize():
            # counts[m, l] = sum_w acc[l, w]: one small MXU dot contracting the
            # lane axis of both operands so labels land lane-dense on lanes.
            ones = jnp.ones((8, _LANES), jnp.float32)
            out_ref[...] = lax.dot_general(
                ones, acc_ref[...],
                dimension_numbers=(((1,), (1,)), ((), ())),
                preferred_element_type=jnp.float32)            # (8, l_pad)

    return kernel


def label_histogram(masks: jax.Array, num_labels: int, *,
                    num_pixel_splits: int = 2,
                    max_tile_rows: int = 1024) -> jax.Array:
    """Per-batch pixel counts per label. masks: (B, H, W) int -> (B, L_pad) f32."""
    B, H, W = masks.shape
    num_labels = int(num_labels)
    l_pad = _round_up(max(num_labels, 1), _LANES)

    total_pix = H * W
    rows = _cdiv(total_pix, _LANES)                  # pixel rows of 128 lanes

    split = max(1, min(int(num_pixel_splits), rows))  # v7x dual-TC work split
    rows_per_split = _cdiv(rows, split)
    if rows_per_split <= max_tile_rows:
        tile_rows = rows_per_split                   # block == full dim
    else:
        tile_rows = max(32, (max_tile_rows // 32) * 32)
        rows_per_split = _round_up(rows_per_split, tile_rows)
    n_p = rows_per_split // tile_rows
    padded_pix = split * rows_per_split * _LANES

    # Narrow mask dtype to halve HBM traffic when the label range allows and
    # the image is big enough for the 16-bit sublane tiling to matter.
    use_i16 = (num_labels < 2 ** 15 - 1) and rows >= 16
    mask_dtype = jnp.int16 if use_i16 else jnp.int32
    sub_rows = 16 if use_i16 else 8

    flat = masks.astype(mask_dtype).reshape(B, total_pix)
    if padded_pix > total_pix:
        # Sentinel == num_labels: never a real label; its lane (if any) is
        # sliced off before the median.
        flat = jnp.pad(flat, ((0, 0), (0, padded_pix - total_pix)),
                       constant_values=num_labels)
    masks_r = flat.reshape(B, split, rows_per_split, _LANES)

    cost = pl.CostEstimate(
        flops=3 * B * padded_pix * l_pad
              + B * split * 2 * 8 * _LANES * l_pad,
        transcendentals=0,
        bytes_accessed=B * padded_pix * jnp.dtype(mask_dtype).itemsize
                       + B * split * 8 * l_pad * 4)

    out = pl.pallas_call(
        _make_hist_kernel(l_pad, tile_rows, sub_rows),
        out_shape=jax.ShapeDtypeStruct((B, split, 8, l_pad), jnp.float32),
        grid=(B, split, n_p),
        in_specs=[pl.BlockSpec((None, None, tile_rows, _LANES),
                               lambda b, s, p: (b, s, p, 0))],
        out_specs=pl.BlockSpec((None, None, 8, l_pad),
                               lambda b, s, p: (b, s, 0, 0)),
        scratch_shapes=[pltpu.VMEM((l_pad, _LANES), jnp.float32)],
        compiler_params=pltpu.CompilerParams(
            dimension_semantics=("parallel", "parallel", "arbitrary"),
            vmem_limit_bytes=32 * 1024 * 1024),
        cost_estimate=cost,
    )(masks_r)

    # All 8 rows of the dot output are identical; take row 0, sum pixel splits.
    return out[:, :, 0, :].sum(axis=1)               # (B, l_pad)


def size_model_forward(masks: jax.Array, num_labels: int, **kw) -> jax.Array:
    """JAX/Pallas equivalent of SizeModel.forward: one diameter per batch elem."""
    counts = label_histogram(masks, num_labels, **kw)     # (B, l_pad)
    counts = counts[:, 1:num_labels]    # drop background + padded label lanes
    # TODO(synk): torch.unique's variable-length output (median over only the
    # labels actually present) has no static-shape kernel form; masked sort in
    # plain JAX on the tiny (B, num_labels-1) count matrix.
    present = counts > 0
    n_present = jnp.sum(present, axis=1).astype(jnp.int32)
    sq = jnp.where(present, jnp.sqrt(counts), jnp.inf)
    sq_sorted = jnp.sort(sq, axis=1)
    idx = jnp.maximum((n_present - 1) // 2, 0)        # torch lower-median
    md = jnp.take_along_axis(sq_sorted, idx[:, None], axis=1)[:, 0]
    md = jnp.where(n_present == 0, jnp.float32(0.0), md)   # isnan -> 0
    md = md / (math.pi ** 0.5 / 2.0)
    return md


def _reference(masks_np: np.ndarray, num_labels: int) -> np.ndarray:
    """Pure numpy reference of the same semantics."""
    B = masks_np.shape[0]
    out = np.zeros((B,), np.float32)
    for b in range(B):
        counts = np.bincount(masks_np[b].ravel(), minlength=num_labels)[1:]
        c = counts[counts > 0].astype(np.float64)
        if c.size == 0:
            md = 0.0
        else:
            md = float(np.sort(np.sqrt(c))[(c.size - 1) // 2])
        out[b] = md / (math.pi ** 0.5 / 2.0)
    return out


if __name__ == "__main__":
    key = jax.random.PRNGKey(0)

    # Small demo shape (single-tile path, int32 masks, split=2).
    B, H, W = 2, 16, 16
    NUM_LABELS = 16                     # labels 0..15; 0 = background
    masks = jax.random.randint(key, (B, H, W), 0, NUM_LABELS, dtype=jnp.int32)
    md = jax.block_until_ready(size_model_forward(masks, NUM_LABELS))
    ref = _reference(np.asarray(masks), NUM_LABELS)
    np.testing.assert_allclose(np.asarray(md), ref, rtol=1e-5, atol=1e-5)

    # Larger check: multi-step reduction axis, in-kernel block loop, pixel
    # padding (sentinel label), int16 masks, >128 labels.
    key2 = jax.random.PRNGKey(0)
    B2, H2, W2 = 1, 96, 96
    NUM_LABELS2 = 200
    masks2 = jax.random.randint(key2, (B2, H2, W2), 0, NUM_LABELS2,
                                dtype=jnp.int32)
    md2 = jax.block_until_ready(
        size_model_forward(masks2, NUM_LABELS2, max_tile_rows=32))
    ref2 = _reference(np.asarray(masks2), NUM_LABELS2)
    np.testing.assert_allclose(np.asarray(md2), ref2, rtol=1e-5, atol=1e-5)

    print("KERNEL_OK")
</pallas_src>

<mosaic_0001>
module attributes {stable_mosaic.version = 11 : i64} {
  func.func @kernel(%arg0: i32, %arg1: i32, %arg2: i32, %arg3: memref<1x1x1x128xi32, #tpu.memory_space<vmem>>, %arg4: memref<1x1x8x128xf32, #tpu.memory_space<vmem>>, %arg5: memref<128x128xf32, #tpu.memory_space<vmem>>) attributes {dimension_semantics = [#tpu.dimension_semantics<parallel>, #tpu.dimension_semantics<parallel>, #tpu.dimension_semantics<arbitrary>], iteration_bounds = array<i64: 2, 2, 1>, scalar_prefetch = 0 : i64, scratch_operands = 1 : i64, tpu.core_type = #tpu.core_type<tc>, window_params = [{transform_indices = @transform_0, window_bounds = array<i64: 1, 1, 1, 128>}, {transform_indices = @transform_1, window_bounds = array<i64: 1, 1, 8, 128>}]} {
    %c0_i32 = arith.constant 0 : i32
    %0 = arith.cmpi eq, %arg2, %c0_i32 : i32
    %1 = arith.extui %0 : i1 to i32
    %c0_i32_0 = arith.constant 0 : i32
    %2 = arith.cmpi ne, %1, %c0_i32_0 : i32
    scf.if %2 {
      %cst = arith.constant 0.000000e+00 : f32
      %16 = vector.broadcast %cst : f32 to vector<128x128xf32>
      %c0_10 = arith.constant 0 : index
      %c0_11 = arith.constant 0 : index
      %17 = vector.load %arg5[%c0_10, %c0_11] : memref<128x128xf32, #tpu.memory_space<vmem>>, vector<128x128xf32>
      tpu.vector_store %arg5[%c0_10, %c0_11], %16 {strides = array<i32>} : memref<128x128xf32, #tpu.memory_space<vmem>>, vector<128x128xf32>,
    } else {
    }
    %3 = tpu.iota {dimensions = array<i32: 0>} : vector<128x128xi32>
    %c0 = arith.constant 0 : index
    %c0_1 = arith.constant 0 : index
    %c0_2 = arith.constant 0 : index
    %c0_3 = arith.constant 0 : index
    %4 = vector.load %arg3[%c0, %c0_1, %c0_2, %c0_3] : memref<1x1x1x128xi32, #tpu.memory_space<vmem>>, vector<1x1x1x128xi32>
    %5 = vector.shape_cast %4 : vector<1x1x1x128xi32> to vector<1x128xi32>
    %c0_4 = arith.constant 0 : index
    %c0_5 = arith.constant 0 : index
    %6 = vector.load %arg5[%c0_4, %c0_5] : memref<128x128xf32, #tpu.memory_space<vmem>>, vector<128x128xf32>
    %7 = vector.broadcast %5 : vector<1x128xi32> to vector<128x128xi32>
    %8 = arith.cmpi eq, %7, %3 : vector<128x128xi32>
    %9 = arith.extui %8 : vector<128x128xi1> to vector<128x128xi32>
    %10 = arith.sitofp %9 : vector<128x128xi32> to vector<128x128xf32>
    %11 = arith.addf %6, %10 : vector<128x128xf32>
    %c0_6 = arith.constant 0 : index
    %c0_7 = arith.constant 0 : index
    %12 = vector.load %arg5[%c0_6, %c0_7] : memref<128x128xf32, #tpu.memory_space<vmem>>, vector<128x128xf32>
    tpu.vector_store %arg5[%c0_6, %c0_7], %11 {strides = array<i32>} : memref<128x128xf32, #tpu.memory_space<vmem>>, vector<128x128xf32>,
    %c0_i32_8 = arith.constant 0 : i32
    %13 = arith.cmpi eq, %arg2, %c0_i32_8 : i32
    %14 = arith.extui %13 : i1 to i32
    %c0_i32_9 = arith.constant 0 : i32
    %15 = arith.cmpi ne, %14, %c0_i32_9 : i32
    scf.if %15 {
      %cst = arith.constant 1.000000e+00 : f32
      %16 = vector.broadcast %cst : f32 to vector<8x128xf32>
      %c0_10 = arith.constant 0 : index
      %c0_11 = arith.constant 0 : index
      %17 = vector.load %arg5[%c0_10, %c0_11] : memref<128x128xf32, #tpu.memory_space<vmem>>, vector<128x128xf32>
      %cst_12 = arith.constant dense<0.000000e+00> : vector<8x128xf32>
      %18 = tpu.matmul %16, %17, %cst_12 {dimension_numbers = #tpu.dot_dimension_numbers<[1], [1], [0], [0], [0, 0, 1, 0], [], []>} : vector<8x128xf32>, vector<128x128xf32>, vector<8x128xf32> -> vector<8x128xf32>
      %c0_13 = arith.constant 0 : index
      %c0_14 = arith.constant 0 : index
      %c0_15 = arith.constant 0 : index
      %c0_16 = arith.constant 0 : index
      %19 = vector.load %arg4[%c0_13, %c0_14, %c0_15, %c0_16] : memref<1x1x8x128xf32, #tpu.memory_space<vmem>>, vector<1x1x8x128xf32>
      %20 = vector.shape_cast %19 : vector<1x1x8x128xf32> to vector<8x128xf32>
      %21 = vector.shape_cast %18 : vector<8x128xf32> to vector<1x1x8x128xf32>
      tpu.vector_store %arg4[%c0_13, %c0_14, %c0_15, %c0_16], %21 {strides = array<i32>} : memref<1x1x8x128xf32, #tpu.memory_space<vmem>>, vector<1x1x8x128xf32>,
    } else {
    }
    return
  }
  func.func @transform_0(%arg0: i32, %arg1: i32, %arg2: i32) -> (i32, i32, i32, i32) {
    %c0_i32 = arith.constant 0 : i32
    %c0_i32_0 = arith.constant 0 : i32
    return %arg0, %arg1, %arg2, %c0_i32 : i32, i32, i32, i32
  }
  func.func @transform_1(%arg0: i32, %arg1: i32, %arg2: i32) -> (i32, i32, i32, i32) {
    %c0_i32 = arith.constant 0 : i32
    %c0_i32_0 = arith.constant 0 : i32
    %c0_i32_1 = arith.constant 0 : i32
    return %arg0, %arg1, %c0_i32, %c0_i32_0 : i32, i32, i32, i32
  }
}

</mosaic_0001>

<llo_original>
// kernel: tpu_custom_call.1
$region0: #{tpu_custom_call.1}
  #allocation0 [shape = 'u32[]', space=smem, size = 0x4, offset = 0x4, fixed_abs, tag = 'smem constant byte address 0x4 - core index']
  #allocation1 [shape = 'u32[144,128]{1,0:T(1,128)}', space=vmem, size = 0x12000, scoped, tag = 'internal scratch']
  #allocation2 [shape = 'f32[128,128]{1,0:T(8,128)}', space=vmem, size = 0x10000, scoped, tag = 'scratch operand']
  %s0 = inlined_call_operand.hbm [shape: s32[2,2,1,128], index: 0, kind: input, shape index: {}]
  %s1 = inlined_call_operand.hbm [shape: f32[2,2,8,128], index: 1, kind: output, shape index: {}]
  %s2 = sld [smem:[#allocation0]]
  $region49: #{tpu_custom_call.1} parent=0
    _
  %s4 = ssub.s32 1, %s2
  %s5 = scalar_select 0, %s4, %s2
  $region1: #{tpu_custom_call.1} parent=0
    #allocation3 [shape = 'u8[1024]{0}', space=vmem, size = 0x400, scoped, tag = 'input window, operand 0']
    #allocation4 [shape = 's32[2]{0}', space=sflag, size = 0x8, scoped, tag = 'scoped memory for tpu_custom_call.1']
    #allocation5 [shape = 's32[2]{0}', space=sflag, size = 0x8, scoped, tag = 'scoped memory for tpu_custom_call.1']
    #allocation6 [shape = 'u8[8192]{0}', space=vmem, size = 0x2000, scoped, tag = 'output window, operand 0']
    %6 = vsyncpa [#allocation4], 0
    %s7 = scalar_lea.sflag [#allocation4], 1
    %8 = vsyncpa %s7, 0
    %9 = vsyncpa [#allocation5], 0
    %s10 = scalar_lea.sflag [#allocation5], 1
    %11 = vsyncpa %s10, 0
    loop: start=0, step=1, limit=6
    $region2: #{tpu_custom_call.1} parent=1 // loop_pre_header
      _
    $region3: #{tpu_custom_call.1} parent=1 // loop_header
      %s13 = sphi 0, %s17
      %p14 = scmp.ge.s32.totalorder %s13, 6
      %s20 = sphi 0, %s39
      %s21 = sphi 0, %s35
      %s22 = sphi 0, %s31
      %s23 = sphi 0, %s20
      %s24 = sphi 0, %s21
      %s25 = sphi 0, %s22
      %s26 = sphi 0, %s23
      %s27 = sphi 0, %s24
      %s28 = sphi 0, %s25
      %s46 = sphi 0, %s48
      %s49 = sphi 0, %s46
      %s50 = sphi 0, %s49
      %s66 = sphi 0, %s50
      %s74 = sphi 0, %s76
      %s77 = sphi 0, %s74
      %s78 = sphi 0, %s77
      %s94 = sphi 0, %s78
    $region4: #{tpu_custom_call.1} parent=1 // loop_header_branch
      %16 = sbr.rel (%p14) target = $region8
    $region5: #{tpu_custom_call.1} parent=1 // loop_body
      %s18 = ssub.s32 %s13, 1
      %s19 = ssub.s32 %s13, 2
      %s29 = sadd.s32 1, %s22
      %p30 = scmp.ge.s32.totalorder %s29, 1
      %s31 = scalar_select %p30, 0, %s29
      %s32 = sadd.s32 1, %s21
      %s33 = scalar_select %p30, %s32, %s21
      %p34 = scmp.ge.s32.totalorder %s33, 2
      %s35 = scalar_select %p34, 0, %s33
      %s36 = sadd.s32 1, %s20
      %s37 = scalar_select %p34, %s36, %s20
      %p38 = scmp.ge.s32.totalorder %s37, 2
      %s39 = scalar_select %p38, 0, %s37
      %s40 = ssub.s32 %s20, %s39
      %s41 = ssub.s32 %s21, %s35
      %s42 = sor.u32 %s40, %s41
      %s43 = ssub.s32 %s22, %s31
      %s44 = sor.u32 %s42, %s43
      %p45 = scmp.eq.s32.totalorder %s44, 0
      %s47 = sadd.s32 %s46, 1
      %s48 = scalar_select %p45, %s46, %s47
      %p51 = pneg %p45
      %p52 = scmp.eq.s32.totalorder %s13, 3
      %p53 = por %p51, %p52
      %p54 = scmp.ne.s32.totalorder %s46, %s49
      %p55 = scmp.eq.s32.totalorder %s13, 0
      %p56 = por %p54, %p55
      %p57 = scmp.ne.s32.totalorder %s46, %s49
      %p58 = scmp.eq.s32.totalorder %s18, 3
      %p59 = por %p57, %p58
      %p60 = scmp.ne.s32.totalorder %s49, %s50
      %p61 = scmp.eq.s32.totalorder %s18, 0
      %p62 = por %p60, %p61
      %p63 = scmp.ne.s32.totalorder %s49, %s50
      %p64 = scmp.eq.s32.totalorder %s19, 3
      %p65 = por %p63, %p64
      %p67 = scmp.ne.s32.totalorder %s50, %s66
      %p68 = scmp.eq.s32.totalorder %s19, 0
      %p69 = por %p67, %p68
      %s70 = ssub.s32 %s20, %s39
      %s71 = ssub.s32 %s21, %s35
      %s72 = sor.u32 %s70, %s71
      %p73 = scmp.eq.s32.totalorder %s72, 0
      %s75 = sadd.s32 %s74, 1
      %s76 = scalar_select %p73, %s74, %s75
      %p79 = pneg %p73
      %p80 = scmp.eq.s32.totalorder %s13, 3
      %p81 = por %p79, %p80
      %p82 = scmp.ne.s32.totalorder %s74, %s77
      %p83 = scmp.eq.s32.totalorder %s13, 0
      %p84 = por %p82, %p83
      %p85 = scmp.ne.s32.totalorder %s74, %s77
      %p86 = scmp.eq.s32.totalorder %s18, 3
      %p87 = por %p85, %p86
      %p88 = scmp.ne.s32.totalorder %s77, %s78
      %p89 = scmp.eq.s32.totalorder %s18, 0
      %p90 = por %p88, %p89
      %p91 = scmp.ne.s32.totalorder %s77, %s78
      %p92 = scmp.eq.s32.totalorder %s19, 3
      %p93 = por %p91, %p92
      %p95 = scmp.ne.s32.totalorder %s78, %s94
      %p96 = scmp.eq.s32.totalorder %s19, 0
      %p97 = por %p95, %p96
      %p98 = scmp.le.s32.totalorder 1, %s13
      %p99 = scmp.lt.s32.totalorder %s13, 5
      %p100 = pnand %p98, %p99
      %p101 = pneg %p100
      // Predicated region
      $region9: #{tpu_custom_call.1} parent=5 // pred_check
        _
      $region10: #{tpu_custom_call.1} parent=5 // pred_check_branch
        %103 = sbr.rel (%p100) target = $region12
      $region11: #{tpu_custom_call.1} parent=5 // pred_region
        %s104 = ssub.s32 %s13, 1
      $region12: #{tpu_custom_call.1} parent=5 // pred_fallthru
        _
      %p105 = scmp.lt.s32.totalorder %s13, 4
      // Predicated region
      $region13: #{tpu_custom_call.1} parent=5 // pred_check
        %p106 = pneg %p105
      $region14: #{tpu_custom_call.1} parent=5 // pred_check_branch
        %108 = sbr.rel (%p106) target = $region16
      $region15: #{tpu_custom_call.1} parent=5 // pred_region
        // Predicated region
        $region17: #{tpu_custom_call.1} parent=15 // pred_check
          %p109 = pneg %p56
        $region18: #{tpu_custom_call.1} parent=15 // pred_check_branch
          %111 = sbr.rel (%p109) target = $region20
        $region19: #{tpu_custom_call.1} parent=15 // pred_region
          %s112 = sand.u32 %s46, 1
          %s113 = scalar_lea.sflag [#allocation4], %s112
          %s114 = sand.u32 %s46, 1
          %s115 = scalar_lea.vmem [#allocation3], %s114
          %s117 = ssub.s32 16, 16
          %118 = vsyncadd %s113, %s117
          %s119 = sadd.s32 %s22, %s21
          %s120 = smul.addr %s20, 2
          %s121 = sadd.s32 %s119, %s120
          %s122 = smul.addr %s121, 16
          %s123 = scalar_lea.hbm %s0, %s122
          %s125 = sshll.u32 %s115, 4
          %s126 = int_to_ptr.vmem [resolvable:$true] %s125
          %128 = dma.hbm_to_vmem [thread:$0]  %s123, 16, %s126, %s113
        $region20: #{tpu_custom_call.1} parent=15 // pred_fallthru
          _
      $region16: #{tpu_custom_call.1} parent=5 // pred_fallthru
        _
      %p129 = scmp.le.s32.totalorder 1, %s13
      %p130 = scmp.lt.s32.totalorder %s13, 5
      %p131 = pnand %p129, %p130
      %p132 = pneg %p131
      // Predicated region
      $region21: #{tpu_custom_call.1} parent=5 // pred_check
        _
      $region22: #{tpu_custom_call.1} parent=5 // pred_check_branch
        %134 = sbr.rel (%p131) target = $region24
      $region23: #{tpu_custom_call.1} parent=5 // pred_region
        %s135 = ssub.s32 %s13, 1
        %s136 = sand.u32 %s49, 1
        %s137 = scalar_lea.sflag [#allocation4], %s136
        %s138 = sand.u32 %s49, 1
        %s139 = scalar_lea.vmem [#allocation3], %s138
        // Predicated region
        $region25: #{tpu_custom_call.1} parent=23 // pred_check
          %p140 = pneg %p62
        $region26: #{tpu_custom_call.1} parent=23 // pred_check_branch
          %142 = sbr.rel (%p140) target = $region28
        $region27: #{tpu_custom_call.1} parent=23 // pred_region
          %143 = dma.done %s137, 16
        $region28: #{tpu_custom_call.1} parent=23 // pred_fallthru
          _
        %s144 = sand.u32 %s49, 1
        %s145 = scalar_lea.sflag [#allocation4], %s144
        %s146 = sand.u32 %s49, 1
        %s147 = scalar_lea.vmem [#allocation3], %s146
        %p148 = pneg %p62
        %p149 = pneg %p59
        %p150 = pneg %p90
        %p151 = pneg %p87
        %s152 = sand.u32 %s77, 1
        %s153 = scalar_lea.sflag [#allocation5], %s152
        %s154 = sand.u32 %s77, 1
        %s155 = smul.addr %s154, 8
        %s156 = scalar_lea.vmem [#allocation6], %s155
        %p157 = scmp.eq.s32.totalorder %s25, 0
        // Predicated region
        $region29: #{tpu_custom_call.1} parent=23 // pred_check
          %p158 = pneg %p157
        $region30: #{tpu_custom_call.1} parent=23 // pred_check_branch
          %160 = sbr.rel (%p158) target = $region32
        $region31: #{tpu_custom_call.1} parent=23 // pred_region
          %161 = vst [vmem:[#allocation2] sm:$0xff] 0.0
          %162 = vst [vmem:[#allocation2 + $0x8] sm:$0xff] 0.0
          %163 = vst [vmem:[#allocation2 + $0x10] sm:$0xff] 0.0
          %164 = vst [vmem:[#allocation2 + $0x18] sm:$0xff] 0.0
          %165 = vst [vmem:[#allocation2 + $0x20] sm:$0xff] 0.0
          %166 = vst [vmem:[#allocation2 + $0x28] sm:$0xff] 0.0
          %167 = vst [vmem:[#allocation2 + $0x30] sm:$0xff] 0.0
          %168 = vst [vmem:[#allocation2 + $0x38] sm:$0xff] 0.0
          %169 = vst [vmem:[#allocation2 + $0x40] sm:$0xff] 0.0
          %170 = vst [vmem:[#allocation2 + $0x48] sm:$0xff] 0.0
          %171 = vst [vmem:[#allocation2 + $0x50] sm:$0xff] 0.0
          %172 = vst [vmem:[#allocation2 + $0x58] sm:$0xff] 0.0
          %173 = vst [vmem:[#allocation2 + $0x60] sm:$0xff] 0.0
          %174 = vst [vmem:[#allocation2 + $0x68] sm:$0xff] 0.0
          %175 = vst [vmem:[#allocation2 + $0x70] sm:$0xff] 0.0
          %176 = vst [vmem:[#allocation2 + $0x78] sm:$0xff] 0.0
        $region32: #{tpu_custom_call.1} parent=23 // pred_fallthru
          _
        %v177 = vlaneseq
        %v178 = vshrl.u32 %v177, 7
        %v179 = vadd.s32 %v178, 8
        %v180 = vadd.s32 %v178, 16
        %v181 = vadd.s32 %v178, 24
        %v182 = vadd.s32 %v178, 32
        %v183 = vadd.s32 %v178, 40
        %v184 = vadd.s32 %v178, 48
        %v185 = vadd.s32 %v178, 56
        %v186 = vadd.s32 %v178, 64
        %v187 = vadd.s32 %v178, 72
        %v188 = vadd.s32 %v178, 80
        %v189 = vadd.s32 %v178, 88
        %v190 = vadd.s32 %v178, 96
        %v191 = vadd.s32 %v178, 104
        %v192 = vadd.s32 %v178, 112
        %v193 = vadd.s32 %v178, 120
        %v194 = vld [vmem:[%s139] sm:$0x1]
        %v195 = vld [vmem:[#allocation2] sm:$0xff]
        %v196 = vld [vmem:[#allocation2 + $0x8] sm:$0xff]
        %v197 = vld [vmem:[#allocation2 + $0x10] sm:$0xff]
        %v198 = vld [vmem:[#allocation2 + $0x18] sm:$0xff]
        %v199 = vld [vmem:[#allocation2 + $0x20] sm:$0xff]
        %v200 = vld [vmem:[#allocation2 + $0x28] sm:$0xff]
        %v201 = vld [vmem:[#allocation2 + $0x30] sm:$0xff]
        %v202 = vld [vmem:[#allocation2 + $0x38] sm:$0xff]
        %v203 = vld [vmem:[#allocation2 + $0x40] sm:$0xff]
        %v204 = vld [vmem:[#allocation2 + $0x48] sm:$0xff]
        %v205 = vld [vmem:[#allocation2 + $0x50] sm:$0xff]
        %v206 = vld [vmem:[#allocation2 + $0x58] sm:$0xff]
        %v207 = vld [vmem:[#allocation2 + $0x60] sm:$0xff]
        %v208 = vld [vmem:[#allocation2 + $0x68] sm:$0xff]
        %v209 = vld [vmem:[#allocation2 + $0x70] sm:$0xff]
        %v210 = vld [vmem:[#allocation2 + $0x78] sm:$0xff]
        %v211 = vlaneseq
        %v212 = vshrl.u32 %v211, 7
        %v213 = vsub.s32 0, %v212
        %v214 = vrot.slane %v194, %v213
        %vm215 = vcmp.eq.s32.totalorder %v214, %v178
        %vm216 = vcmp.eq.s32.totalorder %v214, %v179
        %vm217 = vcmp.eq.s32.totalorder %v214, %v180
        %vm218 = vcmp.eq.s32.totalorder %v214, %v181
        %vm219 = vcmp.eq.s32.totalorder %v214, %v182
        %vm220 = vcmp.eq.s32.totalorder %v214, %v183
        %vm221 = vcmp.eq.s32.totalorder %v214, %v184
        %vm222 = vcmp.eq.s32.totalorder %v214, %v185
        %vm223 = vcmp.eq.s32.totalorder %v214, %v186
        %vm224 = vcmp.eq.s32.totalorder %v214, %v187
        %vm225 = vcmp.eq.s32.totalorder %v214, %v188
        %vm226 = vcmp.eq.s32.totalorder %v214, %v189
        %vm227 = vcmp.eq.s32.totalorder %v214, %v190
        %vm228 = vcmp.eq.s32.totalorder %v214, %v191
        %vm229 = vcmp.eq.s32.totalorder %v214, %v192
        %vm230 = vcmp.eq.s32.totalorder %v214, %v193
        %v231 = vsel %vm215, 1, 0
        %v232 = vsel %vm216, 1, 0
        %v233 = vsel %vm217, 1, 0
        %v234 = vsel %vm218, 1, 0
        %v235 = vsel %vm219, 1, 0
        %v236 = vsel %vm220, 1, 0
        %v237 = vsel %vm221, 1, 0
        %v238 = vsel %vm222, 1, 0
        %v239 = vsel %vm223, 1, 0
        %v240 = vsel %vm224, 1, 0
        %v241 = vsel %vm225, 1, 0
        %v242 = vsel %vm226, 1, 0
        %v243 = vsel %vm227, 1, 0
        %v244 = vsel %vm228, 1, 0
        %v245 = vsel %vm229, 1, 0
        %v246 = vsel %vm230, 1, 0
        %v247 = vcvt.s32.f32 %v231
        %v248 = vcvt.s32.f32 %v232
        %v249 = vcvt.s32.f32 %v233
        %v250 = vcvt.s32.f32 %v234
        %v251 = vcvt.s32.f32 %v235
        %v252 = vcvt.s32.f32 %v236
        %v253 = vcvt.s32.f32 %v237
        %v254 = vcvt.s32.f32 %v238
        %v255 = vcvt.s32.f32 %v239
        %v256 = vcvt.s32.f32 %v240
        %v257 = vcvt.s32.f32 %v241
        %v258 = vcvt.s32.f32 %v242
        %v259 = vcvt.s32.f32 %v243
        %v260 = vcvt.s32.f32 %v244
        %v261 = vcvt.s32.f32 %v245
        %v262 = vcvt.s32.f32 %v246
        %v263 = vadd.f32 %v195, %v247
        %v264 = vadd.f32 %v196, %v248
        %v265 = vadd.f32 %v197, %v249
        %v266 = vadd.f32 %v198, %v250
        %v267 = vadd.f32 %v199, %v251
        %v268 = vadd.f32 %v200, %v252
        %v269 = vadd.f32 %v201, %v253
        %v270 = vadd.f32 %v202, %v254
        %v271 = vadd.f32 %v203, %v255
        %v272 = vadd.f32 %v204, %v256
        %v273 = vadd.f32 %v205, %v257
        %v274 = vadd.f32 %v206, %v258
        %v275 = vadd.f32 %v207, %v259
        %v276 = vadd.f32 %v208, %v260
        %v277 = vadd.f32 %v209, %v261
        %v278 = vadd.f32 %v210, %v262
        %279 = vst [vmem:[#allocation2] sm:$0xff] %v263
        %280 = vst [vmem:[#allocation2 + $0x8] sm:$0xff] %v264
        %281 = vst [vmem:[#allocation2 + $0x10] sm:$0xff] %v265
        %282 = vst [vmem:[#allocation2 + $0x18] sm:$0xff] %v266
        %283 = vst [vmem:[#allocation2 + $0x20] sm:$0xff] %v267
        %284 = vst [vmem:[#allocation2 + $0x28] sm:$0xff] %v268
        %285 = vst [vmem:[#allocation2 + $0x30] sm:$0xff] %v269
        %286 = vst [vmem:[#allocation2 + $0x38] sm:$0xff] %v270
        %287 = vst [vmem:[#allocation2 + $0x40] sm:$0xff] %v271
        %288 = vst [vmem:[#allocation2 + $0x48] sm:$0xff] %v272
        %289 = vst [vmem:[#allocation2 + $0x50] sm:$0xff] %v273
        %290 = vst [vmem:[#allocation2 + $0x58] sm:$0xff] %v274
        %291 = vst [vmem:[#allocation2 + $0x60] sm:$0xff] %v275
        %292 = vst [vmem:[#allocation2 + $0x68] sm:$0xff] %v276
        %293 = vst [vmem:[#allocation2 + $0x70] sm:$0xff] %v277
        %294 = vst [vmem:[#allocation2 + $0x78] sm:$0xff] %v278
        // Predicated region
        $region33: #{tpu_custom_call.1} parent=23 // pred_check
          %p295 = pneg %p157
        $region34: #{tpu_custom_call.1} parent=23 // pred_check_branch
          %297 = sbr.rel (%p295) target = $region36
        $region35: #{tpu_custom_call.1} parent=23 // pred_region
          %v298 = vld [vmem:[#allocation2] sm:$0xff]
          %v299 = vld [vmem:[#allocation2 + $0x8] sm:$0xff]
          %v300 = vld [vmem:[#allocation2 + $0x10] sm:$0xff]
          %v301 = vld [vmem:[#allocation2 + $0x18] sm:$0xff]
          %v302 = vld [vmem:[#allocation2 + $0x20] sm:$0xff]
          %v303 = vld [vmem:[#allocation2 + $0x28] sm:$0xff]
          %v304 = vld [vmem:[#allocation2 + $0x30] sm:$0xff]
          %v305 = vld [vmem:[#allocation2 + $0x38] sm:$0xff]
          %v306 = vld [vmem:[#allocation2 + $0x40] sm:$0xff]
          %v307 = vld [vmem:[#allocation2 + $0x48] sm:$0xff]
          %v308 = vld [vmem:[#allocation2 + $0x50] sm:$0xff]
          %v309 = vld [vmem:[#allocation2 + $0x58] sm:$0xff]
          %v310 = vld [vmem:[#allocation2 + $0x60] sm:$0xff]
          %v311 = vld [vmem:[#allocation2 + $0x68] sm:$0xff]
          %v312 = vld [vmem:[#allocation2 + $0x70] sm:$0xff]
          %v313 = vld [vmem:[#allocation2 + $0x78] sm:$0xff]
          %314 = vmatprep.subr.mxu0 0.0
          %315 = vmatpush1.xpose.msra.mxu0 %v298
          %316 = vmatprep.subr.mxu0 0.0
          %317 = vmatpush1.xpose.msra.mxu0 %v299
          %318 = vmatprep.subr.mxu0 0.0
          %319 = vmatpush1.xpose.msra.mxu0 %v300
          %320 = vmatprep.subr.mxu0 0.0
          %321 = vmatpush1.xpose.msra.mxu0 %v301
          %322 = vmatprep.subr.mxu0 0.0
          %323 = vmatpush1.xpose.msra.mxu0 %v302
          %324 = vmatprep.subr.mxu0 0.0
          %325 = vmatpush1.xpose.msra.mxu0 %v303
          %326 = vmatprep.subr.mxu0 0.0
          %327 = vmatpush1.xpose.msra.mxu0 %v304
          %328 = vmatprep.subr.mxu0 0.0
          %329 = vmatpush1.xpose.msra.mxu0 %v305
          %330 = vmatprep.subr.mxu0 0.0
          %331 = vmatpush1.xpose.msra.mxu0 %v306
          %332 = vmatprep.subr.mxu0 0.0
          %333 = vmatpush1.xpose.msra.mxu0 %v307
          %334 = vmatprep.subr.mxu0 0.0
          %335 = vmatpush1.xpose.msra.mxu0 %v308
          %336 = vmatprep.subr.mxu0 0.0
          %337 = vmatpush1.xpose.msra.mxu0 %v309
          %338 = vmatprep.subr.mxu0 0.0
          %339 = vmatpush1.xpose.msra.mxu0 %v310
          %340 = vmatprep.subr.mxu0 0.0
          %341 = vmatpush1.xpose.msra.mxu0 %v311
          %342 = vmatprep.subr.mxu0 0.0
          %343 = vmatpush1.xpose.msra.mxu0 %v312
          %344 = vmatprep.subr.mxu0 0.0
          %345 = vmatpush1.xpose.msra.mxu0 %v313
          %346 = vmatprep.subr.mxu0 0.0
          %347 = vmatpush1.xpose.msra.mxu0 0.0
          %348 = vmatprep.subr.mxu0 0.0
          %349 = vmatpush1.xpose.msra.mxu0 0.0
          %350 = vmatprep.subr.mxu0 0.0
          %351 = vmatpush1.xpose.msra.mxu0 0.0
          %352 = vmatprep.subr.mxu0 0.0
          %353 = vmatpush1.xpose.msra.mxu0 0.0
          %354 = vmatprep.subr.mxu0 0.0
          %355 = vmatpush1.xpose.msra.mxu0 0.0
          %356 = vmatprep.subr.mxu0 0.0
          %357 = vmatpush1.xpose.msra.mxu0 0.0
          %358 = vmatprep.subr.mxu0 0.0
          %359 = vmatpush1.xpose.msra.mxu0 0.0
          %360 = vmatprep.subr.mxu0 0.0
          %361 = vmatpush1.xpose.msra.mxu0 0.0
          %362 = vmatprep.subr.mxu0 0.0
          %363 = vmatpush1.xpose.msra.mxu0 0.0
          %364 = vmatprep.subr.mxu0 0.0
          %365 = vmatpush1.xpose.msra.mxu0 0.0
          %366 = vmatprep.subr.mxu0 0.0
          %367 = vmatpush1.xpose.msra.mxu0 0.0
          %368 = vmatprep.subr.mxu0 0.0
          %369 = vmatpush1.xpose.msra.mxu0 0.0
          %370 = vmatprep.subr.mxu0 0.0
          %371 = vmatpush1.xpose.msra.mxu0 0.0
          %372 = vmatprep.subr.mxu0 0.0
          %373 = vmatpush1.xpose.msra.mxu0 0.0
          %374 = vmatprep.subr.mxu0 0.0
          %375 = vmatpush1.xpose.msra.mxu0 0.0
          %376 = vmatprep.subr.mxu0 0.0
          %377 = vmatpush1.xpose.msra.mxu0 0.0
          %378 = vmatprep.mubr.f32.mxu0 0.0
          %379 = vmatmul.mubr.f32.gmra.mrb[0].mxu0 1.0
          %v380 = vpop.f32.mrb[0].mxu0
          %v381 = vadd.f32 0.0, %v380
          %v382 = vpop.f32.mrb[0].mxu0
          %383 = vdwg.mxu0
          %384 = vst [vmem:[%s156] sm:$0xff] %v381
        $region36: #{tpu_custom_call.1} parent=23 // pred_fallthru
          _
        %s385 = sand.u32 %s77, 1
        %s386 = scalar_lea.sflag [#allocation5], %s385
        %s387 = sand.u32 %s77, 1
        %s388 = smul.addr %s387, 8
        %s389 = scalar_lea.vmem [#allocation6], %s388
        // Predicated region
        $region37: #{tpu_custom_call.1} parent=23 // pred_check
          %p390 = pneg %p87
        $region38: #{tpu_custom_call.1} parent=23 // pred_check_branch
          %392 = sbr.rel (%p390) target = $region40
        $region39: #{tpu_custom_call.1} parent=23 // pred_region
          %s394 = ssub.s32 128, 128
          %395 = vsyncadd %s386, %s394
          %s396 = smul.addr %s23, 2
          %s397 = sadd.s32 %s24, %s396
          %s398 = smul.addr %s397, 128
          %s399 = scalar_lea.hbm %s1, %s398
          %s401 = sshll.u32 %s389, 4
          %s402 = int_to_ptr.vmem [resolvable:$true] %s401
          %404 = dma.vmem_to_hbm [thread:$0]  %s402, 128, %s399, %s386
        $region40: #{tpu_custom_call.1} parent=23 // pred_fallthru
          _
      $region24: #{tpu_custom_call.1} parent=5 // pred_fallthru
        _
      %p405 = scmp.le.s32.totalorder 2, %s13
      // Predicated region
      $region41: #{tpu_custom_call.1} parent=5 // pred_check
        %p406 = pneg %p405
      $region42: #{tpu_custom_call.1} parent=5 // pred_check_branch
        %408 = sbr.rel (%p406) target = $region44
      $region43: #{tpu_custom_call.1} parent=5 // pred_region
        %s409 = ssub.s32 %s13, 2
        // Predicated region
        $region45: #{tpu_custom_call.1} parent=43 // pred_check
          %p410 = pneg %p93
        $region46: #{tpu_custom_call.1} parent=43 // pred_check_branch
          %412 = sbr.rel (%p410) target = $region48
        $region47: #{tpu_custom_call.1} parent=43 // pred_region
          %s413 = sand.u32 %s78, 1
          %s414 = scalar_lea.sflag [#allocation5], %s413
          %s415 = sand.u32 %s78, 1
          %s416 = smul.addr %s415, 8
          %s417 = scalar_lea.vmem [#allocation6], %s416
          %418 = dma.done %s414, 128
        $region48: #{tpu_custom_call.1} parent=43 // pred_fallthru
          _
      $region44: #{tpu_custom_call.1} parent=5 // pred_fallthru
        _
    $region6: #{tpu_custom_call.1} parent=1 // loop_footer
      %s17 = sadd.s32 1, %s13
    $region7: #{tpu_custom_call.1} parent=1 // loop_footer_branch
      %12 = sbr.rel target = $region3
    $region8: #{tpu_custom_call.1} parent=1 // loop_exit
      _
    %419 = vsyncpa [#allocation4], 1
    %s420 = scalar_lea.sflag [#allocation4], 1
    %421 = vsyncpa %s420, 1
    %422 = vsyncpa [#allocation5], 1
    %s423 = scalar_lea.sflag [#allocation5], 1
    %424 = vsyncpa %s423, 1

</llo_original>
